<compile_context>
chip_gen: v6e
topology: v6e:2x2x1
jax: 0.10.0
libtpu: 0.0.40
codegen_flags: <defaults>
</compile_context>

<pallas_src>
import math

import jax
import jax.numpy as jnp
from jax.experimental import pallas as pl
from jax.experimental.pallas import tpu as pltpu


def _self_channel_attn_kernel(x_ref, w_ref, b_ref, o_ref):
    # x_ref: (TB, Cin, N)   batch tile of the input
    # w_ref: (3*Cout, Cin)  fused q/k/v 1x1-conv weights (q rows pre-scaled by 1/sqrt(Cout))
    # b_ref: (3*Cout, 1)    fused biases (q rows pre-scaled)
    # o_ref: (TB, Cout, N)
    tb = x_ref.shape[0]
    cout = o_ref.shape[1]

    x = x_ref[...].astype(jnp.bfloat16)                       # [TB, Cin, N]
    w = jnp.broadcast_to(w_ref[...].astype(jnp.bfloat16),     # hoisted broadcast (once/step)
                         (tb,) + tuple(w_ref.shape))          # [TB, 3*Cout, Cin]

    # Fused q/k/v projection: one batched MXU matmul, f32 accumulation, then bias.
    qkv = jnp.einsum("boc,bcn->bon", w, x,
                     preferred_element_type=jnp.float32)      # [TB, 3*Cout, N] f32
    qkv = qkv + b_ref[...][None, :, :]                        # bias broadcast over (TB, N)

    q = qkv[:, :cout, :].astype(jnp.bfloat16)                 # scale already folded in
    k = qkv[:, cout:2 * cout, :].astype(jnp.bfloat16)
    v = qkv[:, 2 * cout:, :].astype(jnp.bfloat16)

    # score[b] = q[b] @ k[b]^T : contract the last (N) dim directly, no transpose.
    s = jnp.einsum("bon,bpn->bop", q, k,
                   preferred_element_type=jnp.float32)        # [TB, Cout, Cout] f32

    # Numerically stable softmax over the last dim, in f32.
    m = jnp.max(s, axis=-1, keepdims=True)
    e = jnp.exp(s - m)
    attn = e * pl.reciprocal(jnp.sum(e, axis=-1, keepdims=True), approx=True)

    out = jnp.einsum("bop,bpn->bon", attn.astype(jnp.bfloat16), v,
                     preferred_element_type=jnp.float32)      # [TB, Cout, N] f32
    o_ref[...] = out.astype(o_ref.dtype)


def self_channel_attention(x, wq, bq, wk, bk, wv, bv, *, block_b=4):
    """x: [B, Cin, N] float32 -> [B, Cout, N] float32."""
    B, Cin, N = x.shape
    Cout = wq.shape[0]
    scale = 1.0 / math.sqrt(Cout)

    # Fuse q/k/v weights/biases; fold the 1/sqrt(Cout) score scale into the q block.
    w_qkv = jnp.concatenate([wq * scale, wk, wv], axis=0)            # [3*Cout, Cin]
    b_qkv = jnp.concatenate([bq * scale, bk, bv], axis=0).reshape(3 * Cout, 1)

    # Batch tiling: TB batches per grid step (pad B if needed; padded rows produce
    # finite garbage that is sliced off below).
    TB = max(1, min(block_b, B))
    grid_b = pl.cdiv(B, TB)
    B_pad = grid_b * TB
    if B_pad != B:
        x = jnp.pad(x, ((0, B_pad - B), (0, 0), (0, 0)))

    # Explicit VMEM budget: double-buffered x/out blocks + resident weights + f32
    # intermediates (qkv, q/k/v, score, attn), with 2x slack; keep headroom below
    # v7x's 64 MiB per-core VMEM.
    itm = 4
    blk_bytes = 2 * (TB * Cin * N + TB * Cout * N) * itm            # in + out, dbl-buffered
    w_bytes = 3 * Cout * (Cin + 1) * itm
    interm_bytes = TB * (5 * Cout * N + 2 * Cout * Cout) * itm
    vmem_limit = int(min(max(2 * (blk_bytes + w_bytes + interm_bytes) + (8 << 20),
                             16 << 20),
                         56 << 20))

    out = pl.pallas_call(
        _self_channel_attn_kernel,
        out_shape=jax.ShapeDtypeStruct((B_pad, Cout, N), x.dtype),
        grid_spec=pltpu.PrefetchScalarGridSpec(
            num_scalar_prefetch=0,
            grid=(grid_b,),
            in_specs=[
                pl.BlockSpec((TB, Cin, N), lambda b: (b, 0, 0)),     # batch tile of x
                pl.BlockSpec((3 * Cout, Cin), lambda b: (0, 0)),     # fused weights (resident)
                pl.BlockSpec((3 * Cout, 1), lambda b: (0, 0)),       # fused biases (resident)
            ],
            out_specs=pl.BlockSpec((TB, Cout, N), lambda b: (b, 0, 0)),
        ),
        compiler_params=pltpu.CompilerParams(
            dimension_semantics=("parallel",),                       # megacore-shard the batch
            vmem_limit_bytes=vmem_limit,
        ),
    )(x, w_qkv, b_qkv)

    return out[:B] if B_pad != B else out


def _reference(x, wq, bq, wk, bk, wv, bv):
    # Pure-JAX f32 reference of the PyTorch forward.
    q = jnp.einsum("oc,bcn->bon", wq, x) + bq[None, :, None]
    k = jnp.einsum("oc,bcn->bon", wk, x) + bk[None, :, None]
    v = jnp.einsum("oc,bcn->bon", wv, x) + bv[None, :, None]
    score = jnp.einsum("bon,bpn->bop", q, k) / math.sqrt(wq.shape[0])
    score = jax.nn.softmax(score, axis=-1)
    return jnp.einsum("bop,bpn->bon", score, v)


if __name__ == "__main__":
    # Small but TPU-friendly shapes: N=128 keeps stores lane-dense, B/TB gives an
    # even grid of 2 (both v7x TensorCores busy).
    B, Cin, Cout, N = 8, 8, 16, 128

    key = jax.random.PRNGKey(0)
    kx, kq, kbq, kk, kbk, kv, kbv = jax.random.split(key, 7)

    # Deterministic parameter init (PyTorch Conv1d-style uniform bound).
    bound = 1.0 / math.sqrt(Cin)
    x = jax.random.normal(kx, (B, Cin, N), dtype=jnp.float32)
    wq = jax.random.uniform(kq, (Cout, Cin), jnp.float32, -bound, bound)
    bq = jax.random.uniform(kbq, (Cout,), jnp.float32, -bound, bound)
    wk = jax.random.uniform(kk, (Cout, Cin), jnp.float32, -bound, bound)
    bk = jax.random.uniform(kbk, (Cout,), jnp.float32, -bound, bound)
    wv = jax.random.uniform(kv, (Cout, Cin), jnp.float32, -bound, bound)
    bv = jax.random.uniform(kbv, (Cout,), jnp.float32, -bound, bound)

    out = self_channel_attention(x, wq, bq, wk, bk, wv, bv, block_b=4)
    out = jax.block_until_ready(out)

    ref = _reference(x, wq, bq, wk, bk, wv, bv)
    assert out.shape == (B, Cout, N), out.shape
    # bf16 MXU operands (f32 accumulation) -> loosened tolerance vs. the f32 reference.
    assert jnp.allclose(out, ref, atol=5e-2, rtol=5e-2), \
        float(jnp.max(jnp.abs(out - ref)))

    print("KERNEL_OK")
</pallas_src>

<mosaic_0001>
module attributes {stable_mosaic.version = 11 : i64} {
  func.func @_self_channel_attn_kernel(%arg0: i32, %arg1: memref<4x8x128xf32, #tpu.memory_space<vmem>>, %arg2: memref<48x8xf32, #tpu.memory_space<vmem>>, %arg3: memref<48x1xf32, #tpu.memory_space<vmem>>, %arg4: memref<4x16x128xf32, #tpu.memory_space<vmem>>) attributes {dimension_semantics = [#tpu.dimension_semantics<parallel>], iteration_bounds = array<i64: 2>, scalar_prefetch = 0 : i64, scratch_operands = 0 : i64, tpu.core_type = #tpu.core_type<tc>, window_params = [{transform_indices = @transform_0, window_bounds = array<i64: 4, 8, 128>}, {pipeline_mode = #tpu.pipeline_mode<synchronous>, transform_indices = @transform_1, window_bounds = array<i64: 48, 8>}, {pipeline_mode = #tpu.pipeline_mode<synchronous>, transform_indices = @transform_2, window_bounds = array<i64: 48, 1>}, {transform_indices = @transform_3, window_bounds = array<i64: 4, 16, 128>}]} {
    %c0 = arith.constant 0 : index
    %c0_0 = arith.constant 0 : index
    %c0_1 = arith.constant 0 : index
    %0 = vector.load %arg1[%c0, %c0_0, %c0_1] : memref<4x8x128xf32, #tpu.memory_space<vmem>>, vector<4x8x128xf32>
    %1 = arith.truncf %0 : vector<4x8x128xf32> to vector<4x8x128xbf16>
    %c0_2 = arith.constant 0 : index
    %c0_3 = arith.constant 0 : index
    %2 = vector.load %arg2[%c0_2, %c0_3] : memref<48x8xf32, #tpu.memory_space<vmem>>, vector<48x8xf32>
    %3 = arith.truncf %2 : vector<48x8xf32> to vector<48x8xbf16>
    %4 = vector.shape_cast %3 : vector<48x8xbf16> to vector<1x48x8xbf16>
    %5 = vector.broadcast %4 : vector<1x48x8xbf16> to vector<4x48x8xbf16>
    "tpu.trace_start"() <{level = 10 : i32, message = "boc,bcn->bon"}> : () -> ()
    %cst = arith.constant dense<0.000000e+00> : vector<4x48x128xf32>
    %6 = tpu.matmul %5, %1, %cst {dimension_numbers = #tpu.dot_dimension_numbers<[2], [1], [1], [2], [0, 0, 0, 1, 1, 2], [0], [0]>} : vector<4x48x8xbf16>, vector<4x8x128xbf16>, vector<4x48x128xf32> -> vector<4x48x128xf32>
    "tpu.trace_stop"() : () -> ()
    %c0_4 = arith.constant 0 : index
    %c0_5 = arith.constant 0 : index
    %7 = vector.load %arg3[%c0_4, %c0_5] : memref<48x1xf32, #tpu.memory_space<vmem>>, vector<48x1xf32>
    %8 = vector.shape_cast %7 : vector<48x1xf32> to vector<1x48x1xf32>
    %9 = vector.broadcast %8 : vector<1x48x1xf32> to vector<4x48x128xf32>
    %10 = arith.addf %6, %9 : vector<4x48x128xf32>
    %11 = vector.extract_strided_slice %10 {offsets = [0, 0, 0], sizes = [4, 16, 128], strides = [1, 1, 1]} : vector<4x48x128xf32> to vector<4x16x128xf32>
    %12 = arith.truncf %11 : vector<4x16x128xf32> to vector<4x16x128xbf16>
    %13 = vector.extract_strided_slice %10 {offsets = [0, 16, 0], sizes = [4, 16, 128], strides = [1, 1, 1]} : vector<4x48x128xf32> to vector<4x16x128xf32>
    %14 = arith.truncf %13 : vector<4x16x128xf32> to vector<4x16x128xbf16>
    %15 = vector.extract_strided_slice %10 {offsets = [0, 32, 0], sizes = [4, 16, 128], strides = [1, 1, 1]} : vector<4x48x128xf32> to vector<4x16x128xf32>
    %16 = arith.truncf %15 : vector<4x16x128xf32> to vector<4x16x128xbf16>
    "tpu.trace_start"() <{level = 10 : i32, message = "bon,bpn->bop"}> : () -> ()
    %cst_6 = arith.constant dense<0.000000e+00> : vector<4x16x16xf32>
    %17 = tpu.matmul %12, %14, %cst_6 {dimension_numbers = #tpu.dot_dimension_numbers<[2], [2], [1], [1], [0, 0, 0, 1, 1, 1], [0], [0]>} : vector<4x16x128xbf16>, vector<4x16x128xbf16>, vector<4x16x16xf32> -> vector<4x16x16xf32>
    "tpu.trace_stop"() : () -> ()
    %cst_7 = arith.constant dense<0xFF800000> : vector<4x16xf32>
    %18 = vector.multi_reduction <maximumf>, %17, %cst_7 [2] : vector<4x16x16xf32> to vector<4x16xf32>
    %19 = vector.shape_cast %18 : vector<4x16xf32> to vector<4x16x1xf32>
    %20 = vector.broadcast %19 : vector<4x16x1xf32> to vector<4x16x16xf32>
    %21 = arith.subf %17, %20 : vector<4x16x16xf32>
    %22 = math.exp %21 : vector<4x16x16xf32>
    %cst_8 = arith.constant dense<0.000000e+00> : vector<4x16xf32>
    %23 = vector.multi_reduction <add>, %22, %cst_8 [2] : vector<4x16x16xf32> to vector<4x16xf32>
    %24 = vector.shape_cast %23 : vector<4x16xf32> to vector<4x16x1xf32>
    %25 = tpu.reciprocal %24 {approx = true} : vector<4x16x1xf32> -> vector<4x16x1xf32>
    %26 = vector.broadcast %25 : vector<4x16x1xf32> to vector<4x16x16xf32>
    %27 = arith.mulf %22, %26 : vector<4x16x16xf32>
    %28 = arith.truncf %27 : vector<4x16x16xf32> to vector<4x16x16xbf16>
    "tpu.trace_start"() <{level = 10 : i32, message = "bop,bpn->bon"}> : () -> ()
    %cst_9 = arith.constant dense<0.000000e+00> : vector<4x16x128xf32>
    %29 = tpu.matmul %28, %16, %cst_9 {dimension_numbers = #tpu.dot_dimension_numbers<[2], [1], [1], [2], [0, 0, 0, 1, 1, 2], [0], [0]>} : vector<4x16x16xbf16>, vector<4x16x128xbf16>, vector<4x16x128xf32> -> vector<4x16x128xf32>
    "tpu.trace_stop"() : () -> ()
    %c0_10 = arith.constant 0 : index
    %c0_11 = arith.constant 0 : index
    %c0_12 = arith.constant 0 : index
    %30 = vector.load %arg4[%c0_10, %c0_11, %c0_12] : memref<4x16x128xf32, #tpu.memory_space<vmem>>, vector<4x16x128xf32>
    tpu.vector_store %arg4[%c0_10, %c0_11, %c0_12], %29 {strides = array<i32>} : memref<4x16x128xf32, #tpu.memory_space<vmem>>, vector<4x16x128xf32>,
    return
  }
  func.func @transform_0(%arg0: i32) -> (i32, i32, i32) {
    %c0_i32 = arith.constant 0 : i32
    %c0_i32_0 = arith.constant 0 : i32
    %c0_i32_1 = arith.constant 0 : i32
    return %arg0, %c0_i32, %c0_i32_0 : i32, i32, i32
  }
  func.func @transform_1(%arg0: i32) -> (i32, i32) {
    %c0_i32 = arith.constant 0 : i32
    %c0_i32_0 = arith.constant 0 : i32
    %c0_i32_1 = arith.constant 0 : i32
    return %c0_i32, %c0_i32_0 : i32, i32
  }
  func.func @transform_2(%arg0: i32) -> (i32, i32) {
    %c0_i32 = arith.constant 0 : i32
    %c0_i32_0 = arith.constant 0 : i32
    %c0_i32_1 = arith.constant 0 : i32
    return %c0_i32, %c0_i32_0 : i32, i32
  }
  func.func @transform_3(%arg0: i32) -> (i32, i32, i32) {
    %c0_i32 = arith.constant 0 : i32
    %c0_i32_0 = arith.constant 0 : i32
    %c0_i32_1 = arith.constant 0 : i32
    return %arg0, %c0_i32, %c0_i32_0 : i32, i32, i32
  }
}

</mosaic_0001>

<llo_original>
// kernel: tpu_custom_call.1
$region0: #{tpu_custom_call.1}
  #allocation0 [shape = 'u32[]', space=smem, size = 0x4, offset = 0x4, fixed_abs, tag = 'smem constant byte address 0x4 - core index']
  #allocation1 [shape = 'u32[144,128]{1,0:T(1,128)}', space=vmem, size = 0x12000, scoped, tag = 'internal scratch']
  %s0 = inlined_call_operand.vmem [shape: f32[8,8,128], index: 0, kind: input, shape index: {}]
  %s1 = inlined_call_operand.vmem [shape: f32[48,8], index: 1, kind: input, shape index: {}]
  %s2 = inlined_call_operand.vmem [shape: f32[48,1], index: 2, kind: input, shape index: {}]
  %s3 = inlined_call_operand.hbm [shape: f32[8,16,128], index: 3, kind: output, shape index: {}]
  %s4 = sld [smem:[#allocation0]]
  $region45: #{tpu_custom_call.1} parent=0
    _
  %s6 = ssub.s32 1, %s4
  %s7 = scalar_select 0, %s6, %s4
  $region1: #{tpu_custom_call.1} parent=0
    #allocation2 [shape = 'u8[65536]{0}', space=vmem, size = 0x10000, scoped, tag = 'output window, operand 0']
    #allocation3 [shape = 's32[2]{0}', space=sflag, size = 0x8, scoped, tag = 'scoped memory for tpu_custom_call.1']
    %8 = vsyncpa [#allocation3], 0
    %s9 = scalar_lea.sflag [#allocation3], 1
    %10 = vsyncpa %s9, 0
    loop: start=0, step=1, limit=4
    $region2: #{tpu_custom_call.1} parent=1 // loop_pre_header
      _
    $region3: #{tpu_custom_call.1} parent=1 // loop_header
      %s12 = sphi 0, %s16
      %p13 = scmp.ge.s32.totalorder %s12, 4
      %s22 = sphi 0, %s24
      %s25 = sphi 0, %s22
      %s26 = sphi 0, %s25
      %s42 = sphi 0, %s26
      %s46 = sphi 0, %s46
      %s48 = sphi 0, %s46
      %s49 = sphi 0, %s48
      %s63 = sphi 0, %s49
      %s67 = sphi 0, %s67
      %s69 = sphi 0, %s67
      %s70 = sphi 0, %s69
      %s84 = sphi 0, %s70
      %s90 = sphi 0, %s92
      %s93 = sphi 0, %s90
      %s94 = sphi 0, %s93
      %s110 = sphi 0, %s94
    $region4: #{tpu_custom_call.1} parent=1 // loop_header_branch
      %15 = sbr.rel (%p13) target = $region8
    $region5: #{tpu_custom_call.1} parent=1 // loop_body
      %s17 = ssub.s32 %s12, 1
      %s18 = ssub.s32 %s12, 2
      %s19 = sadd.s32 %s12, 1
      %s20 = ssub.s32 %s12, %s19
      %p21 = scmp.eq.s32.totalorder %s20, 0
      %s23 = sadd.s32 %s22, 1
      %s24 = scalar_select %p21, %s22, %s23
      %p27 = pneg %p21
      %p28 = scmp.eq.s32.totalorder %s12, 1
      %p29 = por %p27, %p28
      %p30 = scmp.ne.s32.totalorder %s22, %s25
      %p31 = scmp.eq.s32.totalorder %s12, 0
      %p32 = por %p30, %p31
      %p33 = scmp.ne.s32.totalorder %s22, %s25
      %p34 = scmp.eq.s32.totalorder %s17, 1
      %p35 = por %p33, %p34
      %p36 = scmp.ne.s32.totalorder %s25, %s26
      %p37 = scmp.eq.s32.totalorder %s17, 0
      %p38 = por %p36, %p37
      %p39 = scmp.ne.s32.totalorder %s25, %s26
      %p40 = scmp.eq.s32.totalorder %s18, 1
      %p41 = por %p39, %p40
      %p43 = scmp.ne.s32.totalorder %s26, %s42
      %p44 = scmp.eq.s32.totalorder %s18, 0
      %p45 = por %p43, %p44
      %s47 = sadd.s32 %s46, 1
      %p50 = scmp.eq.s32.totalorder %s12, 1
      %p51 = scmp.ne.s32.totalorder %s46, %s48
      %p52 = scmp.eq.s32.totalorder %s12, 0
      %p53 = por %p51, %p52
      %p54 = scmp.ne.s32.totalorder %s46, %s48
      %p55 = scmp.eq.s32.totalorder %s17, 1
      %p56 = por %p54, %p55
      %p57 = scmp.ne.s32.totalorder %s48, %s49
      %p58 = scmp.eq.s32.totalorder %s17, 0
      %p59 = por %p57, %p58
      %p60 = scmp.ne.s32.totalorder %s48, %s49
      %p61 = scmp.eq.s32.totalorder %s18, 1
      %p62 = por %p60, %p61
      %p64 = scmp.ne.s32.totalorder %s49, %s63
      %p65 = scmp.eq.s32.totalorder %s18, 0
      %p66 = por %p64, %p65
      %s68 = sadd.s32 %s67, 1
      %p71 = scmp.eq.s32.totalorder %s12, 1
      %p72 = scmp.ne.s32.totalorder %s67, %s69
      %p73 = scmp.eq.s32.totalorder %s12, 0
      %p74 = por %p72, %p73
      %p75 = scmp.ne.s32.totalorder %s67, %s69
      %p76 = scmp.eq.s32.totalorder %s17, 1
      %p77 = por %p75, %p76
      %p78 = scmp.ne.s32.totalorder %s69, %s70
      %p79 = scmp.eq.s32.totalorder %s17, 0
      %p80 = por %p78, %p79
      %p81 = scmp.ne.s32.totalorder %s69, %s70
      %p82 = scmp.eq.s32.totalorder %s18, 1
      %p83 = por %p81, %p82
      %p85 = scmp.ne.s32.totalorder %s70, %s84
      %p86 = scmp.eq.s32.totalorder %s18, 0
      %p87 = por %p85, %p86
      %s88 = ssub.s32 %s12, %s19
      %p89 = scmp.eq.s32.totalorder %s88, 0
      %s91 = sadd.s32 %s90, 1
      %s92 = scalar_select %p89, %s90, %s91
      %p95 = pneg %p89
      %p96 = scmp.eq.s32.totalorder %s12, 1
      %p97 = por %p95, %p96
      %p98 = scmp.ne.s32.totalorder %s90, %s93
      %p99 = scmp.eq.s32.totalorder %s12, 0
      %p100 = por %p98, %p99
      %p101 = scmp.ne.s32.totalorder %s90, %s93
      %p102 = scmp.eq.s32.totalorder %s17, 1
      %p103 = por %p101, %p102
      %p104 = scmp.ne.s32.totalorder %s93, %s94
      %p105 = scmp.eq.s32.totalorder %s17, 0
      %p106 = por %p104, %p105
      %p107 = scmp.ne.s32.totalorder %s93, %s94
      %p108 = scmp.eq.s32.totalorder %s18, 1
      %p109 = por %p107, %p108
      %p111 = scmp.ne.s32.totalorder %s94, %s110
      %p112 = scmp.eq.s32.totalorder %s18, 0
      %p113 = por %p111, %p112
      %p114 = scmp.le.s32.totalorder 1, %s12
      %p115 = scmp.lt.s32.totalorder %s12, 3
      %p116 = pnand %p114, %p115
      %p117 = pneg %p116
      // Predicated region
      $region9: #{tpu_custom_call.1} parent=5 // pred_check
        _
      $region10: #{tpu_custom_call.1} parent=5 // pred_check_branch
        %119 = sbr.rel (%p116) target = $region12
      $region11: #{tpu_custom_call.1} parent=5 // pred_region
        %s120 = ssub.s32 %s12, 1
        // Predicated region
        $region13: #{tpu_custom_call.1} parent=11 // pred_check
          %p121 = pneg %p59
        $region14: #{tpu_custom_call.1} parent=11 // pred_check_branch
          %123 = sbr.rel (%p121) target = $region16
        $region15: #{tpu_custom_call.1} parent=11 // pred_region
          _
        $region16: #{tpu_custom_call.1} parent=11 // pred_fallthru
          _
        // Predicated region
        $region17: #{tpu_custom_call.1} parent=11 // pred_check
          %p124 = pneg %p80
        $region18: #{tpu_custom_call.1} parent=11 // pred_check_branch
          %126 = sbr.rel (%p124) target = $region20
        $region19: #{tpu_custom_call.1} parent=11 // pred_region
          _
        $region20: #{tpu_custom_call.1} parent=11 // pred_fallthru
          _
      $region12: #{tpu_custom_call.1} parent=5 // pred_fallthru
        _
      %p127 = scmp.lt.s32.totalorder %s12, 2
      // Predicated region
      $region21: #{tpu_custom_call.1} parent=5 // pred_check
        %p128 = pneg %p127
      $region22: #{tpu_custom_call.1} parent=5 // pred_check_branch
        %130 = sbr.rel (%p128) target = $region24
      $region23: #{tpu_custom_call.1} parent=5 // pred_region
        // Predicated region
        $region25: #{tpu_custom_call.1} parent=23 // pred_check
          %p131 = pneg %p32
        $region26: #{tpu_custom_call.1} parent=23 // pred_check_branch
          %133 = sbr.rel (%p131) target = $region28
        $region27: #{tpu_custom_call.1} parent=23 // pred_region
          %s134 = smul.u32 4, %s12
          %p135 = scmp.lt.s32.totalorder %s134, 7
          %s136 = scalar_select %p135, %s134, 7
          %s137 = smul.addr %s136, 8
          %s138 = scalar_lea.vmem %s0, %s137
          %s139 = smul.u32 4, %s12
        $region28: #{tpu_custom_call.1} parent=23 // pred_fallthru
          _
      $region24: #{tpu_custom_call.1} parent=5 // pred_fallthru
        _
      %p140 = scmp.le.s32.totalorder 1, %s12
      %p141 = scmp.lt.s32.totalorder %s12, 3
      %p142 = pnand %p140, %p141
      %p143 = pneg %p142
      // Predicated region
      $region29: #{tpu_custom_call.1} parent=5 // pred_check
        _
      $region30: #{tpu_custom_call.1} parent=5 // pred_check_branch
        %145 = sbr.rel (%p142) target = $region32
      $region31: #{tpu_custom_call.1} parent=5 // pred_region
        %s146 = ssub.s32 %s12, 1
        %s147 = smul.u32 4, %s17
        %p148 = scmp.lt.s32.totalorder %s147, 7
        %s149 = scalar_select %p148, %s147, 7
        %s150 = smul.addr %s149, 8
        %s151 = scalar_lea.vmem %s0, %s150
        %p152 = pneg %p38
        %p153 = pneg %p35
        %p154 = pneg %p59
        %p155 = pneg %p56
        %p156 = pneg %p80
        %p157 = pneg %p77
        %p158 = pneg %p106
        %p159 = pneg %p103
        %s160 = sand.u32 %s93, 1
        %s161 = scalar_lea.sflag [#allocation3], %s160
        %s162 = sand.u32 %s93, 1
        %s163 = smul.addr %s162, 64
        %s164 = scalar_lea.vmem [#allocation2], %s163
        %s165 = smul.u32 4, %s17
        %p166 = scmp.lt.s32.totalorder %s165, 7
        %s167 = scalar_select %p166, %s165, 7
        %s168 = smul.addr %s167, 8
        %s169 = scalar_lea.vmem %s0, %s168
        %s170 = smul.u32 4, %s17
        %s171 = smul.u32 4, %s17
        %v173 = vld [vmem:[%s169] sm:$0xff]
        %v174 = vld [vmem:[%s169 + $0x8] sm:$0xff]
        %v175 = vld [vmem:[%s169 + $0x10] sm:$0xff]
        %v176 = vld [vmem:[%s169 + $0x18] sm:$0xff]
        %v177 = vpack.c.bf16 %v173, %v173
        %v178 = vpack.c.bf16 %v174, %v174
        %v179 = vpack.c.bf16 %v175, %v175
        %v180 = vpack.c.bf16 %v176, %v176
        %v181 = vld [vmem:[%s1] sm:$0xff]
        %v182 = vld [vmem:[%s1 + $0x8] sm:$0xff]
        %v183 = vld [vmem:[%s1 + $0x10] sm:$0xff]
        %v184 = vld [vmem:[%s1 + $0x18] sm:$0xff]
        %v185 = vld [vmem:[%s1 + $0x20] sm:$0xff]
        %v186 = vld [vmem:[%s1 + $0x28] sm:$0xff]
        %v187 = vpack.c.bf16 %v182, %v181
        %v188 = vpack.c.bf16 %v184, %v183
        %v189 = vpack.c.bf16 %v186, %v185
        %v190 = vld [vmem:[%s2] sm:$0xff]
        %v191 = vld [vmem:[%s2 + $0x8] sm:$0xff]
        %v192 = vld [vmem:[%s2 + $0x10] sm:$0xff]
        %v193 = vld [vmem:[%s2 + $0x18] sm:$0xff]
        %v194 = vld [vmem:[%s2 + $0x20] sm:$0xff]
        %v195 = vld [vmem:[%s2 + $0x28] sm:$0xff]
        %197 = vset.pattern.permute.xlu0 0
        %198 = vperm.xlu0 %197, %v190
        %v199 = vpop.permute.xlu0 %198
        %202 = vset.pattern.permute.xlu0 0
        %203 = vperm.xlu0 %202, %v191
        %v204 = vpop.permute.xlu0 %203
        %207 = vset.pattern.permute.xlu0 0
        %208 = vperm.xlu0 %207, %v192
        %v209 = vpop.permute.xlu0 %208
        %212 = vset.pattern.permute.xlu0 0
        %213 = vperm.xlu0 %212, %v193
        %v214 = vpop.permute.xlu0 %213
        %217 = vset.pattern.permute.xlu0 0
        %218 = vperm.xlu0 %217, %v194
        %v219 = vpop.permute.xlu0 %218
        %222 = vset.pattern.permute.xlu0 0
        %223 = vperm.xlu0 %222, %v195
        %v224 = vpop.permute.xlu0 %223
        %vm226 = vcmask 64512
        %v228 = vsel %vm226, %v187, 0
        %v231 = vsel %vm226, %v188, 0
        %v234 = vsel %vm226, %v189, 0
        %vm236 = vcmask 1043456
        %v238 = vsel %vm236, %v177, 0
        %240 = vmatprep.subr.bf16.mxu0 0
        %241 = vmatpush1.bf16.msra.mxu0 0
        %242 = vmatprep.subr.bf16.mxu0 0
        %243 = vmatpush1.bf16.msra.mxu0 0
        %244 = vmatprep.subr.bf16.mxu0 0
        %245 = vmatpush1.bf16.msra.mxu0 0
        %246 = vmatprep.subr.bf16.mxu0 0
        %247 = vmatpush1.bf16.msra.mxu0 0
        %248 = vmatprep.subr.bf16.mxu0 0
        %249 = vmatpush1.bf16.msra.mxu0 0
        %250 = vmatprep.subr.bf16.mxu0 0
        %251 = vmatpush1.bf16.msra.mxu0 0
        %252 = vmatprep.subr.bf16.mxu0 0
        %253 = vmatpush1.bf16.msra.mxu0 0
        %254 = vmatprep.subr.bf16.mxu0 0
        %255 = vmatpush1.bf16.msra.mxu0 %v238
        %256 = vmatprep.subr.bf16.mxu0 0
        %257 = vmatpush2.bf16.msra.mxu0 0
        %258 = vmatprep.subr.bf16.mxu0 0
        %259 = vmatpush2.bf16.msra.mxu0 0
        %260 = vmatprep.subr.bf16.mxu0 0
        %261 = vmatpush2.bf16.msra.mxu0 0
        %262 = vmatprep.subr.bf16.mxu0 0
        %263 = vmatpush2.bf16.msra.mxu0 0
        %264 = vmatprep.subr.bf16.mxu0 0
        %265 = vmatpush2.bf16.msra.mxu0 0
        %266 = vmatprep.subr.bf16.mxu0 0
        %267 = vmatpush2.bf16.msra.mxu0 0
        %268 = vmatprep.subr.bf16.mxu0 0
        %269 = vmatpush2.bf16.msra.mxu0 0
        %270 = vmatprep.subr.bf16.mxu0 0
        %271 = vmatpush2.bf16.msra.mxu0 0
        %272 = vmatprep.mubr.bf16.mxu0 0
        %273 = vmatmul.mubr.bf16.gmra.mxu0 %v228
        %v274 = vpop.f32.mrf.mxu0
        %v275 = vadd.f32 %v199, %v274
        %v276 = vpop.f32.mrf.mxu0
        %v277 = vpop.f32.mrf.mxu0
        %v278 = vadd.f32 %v204, %v277
        %v279 = vpop.f32.mrf.mxu0
        %280 = vmatprep.mubr.bf16.mxu0 0
        %281 = vmatmul.mubr.bf16.gmra.mxu0 %v231
        %v282 = vpop.f32.mrf.mxu0
        %v283 = vadd.f32 %v209, %v282
        %v284 = vpop.f32.mrf.mxu0
        %v285 = vpop.f32.mrf.mxu0
        %v286 = vadd.f32 %v214, %v285
        %v287 = vpop.f32.mrf.mxu0
        %288 = vmatprep.mubr.bf16.mxu0 0
        %289 = vmatmul.mubr.bf16.gmra.mxu0 %v234
        %v290 = vpop.f32.mrf.mxu0
        %v291 = vadd.f32 %v219, %v290
        %v292 = vpop.f32.mrf.mxu0
        %v293 = vpop.f32.mrf.mxu0
        %v294 = vadd.f32 %v224, %v293
        %v295 = vpop.f32.mrf.mxu0
        %296 = vdwg.mxu0
        %v298 = vsel %vm236, %v178, 0
        %300 = vmatprep.subr.bf16.mxu0 0
        %301 = vmatpush1.bf16.msra.mxu0 0
        %302 = vmatprep.subr.bf16.mxu0 0
        %303 = vmatpush1.bf16.msra.mxu0 0
        %304 = vmatprep.subr.bf16.mxu0 0
        %305 = vmatpush1.bf16.msra.mxu0 0
        %306 = vmatprep.subr.bf16.mxu0 0
        %307 = vmatpush1.bf16.msra.mxu0 0
        %308 = vmatprep.subr.bf16.mxu0 0
        %309 = vmatpush1.bf16.msra.mxu0 0
        %310 = vmatprep.subr.bf16.mxu0 0
        %311 = vmatpush1.bf16.msra.mxu0 0
        %312 = vmatprep.subr.bf16.mxu0 0
        %313 = vmatpush1.bf16.msra.mxu0 0
        %314 = vmatprep.subr.bf16.mxu0 0
        %315 = vmatpush1.bf16.msra.mxu0 %v298
        %316 = vmatprep.subr.bf16.mxu0 0
        %317 = vmatpush2.bf16.msra.mxu0 0
        %318 = vmatprep.subr.bf16.mxu0 0
        %319 = vmatpush2.bf16.msra.mxu0 0
        %320 = vmatprep.subr.bf16.mxu0 0
        %321 = vmatpush2.bf16.msra.mxu0 0
        %322 = vmatprep.subr.bf16.mxu0 0
        %323 = vmatpush2.bf16.msra.mxu0 0
        %324 = vmatprep.subr.bf16.mxu0 0
        %325 = vmatpush2.bf16.msra.mxu0 0
        %326 = vmatprep.subr.bf16.mxu0 0
        %327 = vmatpush2.bf16.msra.mxu0 0
        %328 = vmatprep.subr.bf16.mxu0 0
        %329 = vmatpush2.bf16.msra.mxu0 0
        %330 = vmatprep.subr.bf16.mxu0 0
        %331 = vmatpush2.bf16.msra.mxu0 0
        %332 = vmatprep.mubr.bf16.mxu0 0
        %333 = vmatmul.mubr.bf16.gmra.mxu0 %v228
        %v334 = vpop.f32.mrf.mxu0
        %v335 = vadd.f32 %v199, %v334
        %v336 = vpop.f32.mrf.mxu0
        %v337 = vpop.f32.mrf.mxu0
        %v338 = vadd.f32 %v204, %v337
        %v339 = vpop.f32.mrf.mxu0
        %340 = vmatprep.mubr.bf16.mxu0 0
        %341 = vmatmul.mubr.bf16.gmra.mxu0 %v231
        %v342 = vpop.f32.mrf.mxu0
        %v343 = vadd.f32 %v209, %v342
        %v344 = vpop.f32.mrf.mxu0
        %v345 = vpop.f32.mrf.mxu0
        %v346 = vadd.f32 %v214, %v345
        %v347 = vpop.f32.mrf.mxu0
        %348 = vmatprep.mubr.bf16.mxu0 0
        %349 = vmatmul.mubr.bf16.gmra.mxu0 %v234
        %v350 = vpop.f32.mrf.mxu0
        %v351 = vadd.f32 %v219, %v350
        %v352 = vpop.f32.mrf.mxu0
        %v353 = vpop.f32.mrf.mxu0
        %v354 = vadd.f32 %v224, %v353
        %v355 = vpop.f32.mrf.mxu0
        %356 = vdwg.mxu0
        %v358 = vsel %vm236, %v179, 0
        %360 = vmatprep.subr.bf16.mxu0 0
        %361 = vmatpush1.bf16.msra.mxu0 0
        %362 = vmatprep.subr.bf16.mxu0 0
        %363 = vmatpush1.bf16.msra.mxu0 0
        %364 = vmatprep.subr.bf16.mxu0 0
        %365 = vmatpush1.bf16.msra.mxu0 0
        %366 = vmatprep.subr.bf16.mxu0 0
        %367 = vmatpush1.bf16.msra.mxu0 0
        %368 = vmatprep.subr.bf16.mxu0 0
        %369 = vmatpush1.bf16.msra.mxu0 0
        %370 = vmatprep.subr.bf16.mxu0 0
        %371 = vmatpush1.bf16.msra.mxu0 0
        %372 = vmatprep.subr.bf16.mxu0 0
        %373 = vmatpush1.bf16.msra.mxu0 0
        %374 = vmatprep.subr.bf16.mxu0 0
        %375 = vmatpush1.bf16.msra.mxu0 %v358
        %376 = vmatprep.subr.bf16.mxu0 0
        %377 = vmatpush2.bf16.msra.mxu0 0
        %378 = vmatprep.subr.bf16.mxu0 0
        %379 = vmatpush2.bf16.msra.mxu0 0
        %380 = vmatprep.subr.bf16.mxu0 0
        %381 = vmatpush2.bf16.msra.mxu0 0
        %382 = vmatprep.subr.bf16.mxu0 0
        %383 = vmatpush2.bf16.msra.mxu0 0
        %384 = vmatprep.subr.bf16.mxu0 0
        %385 = vmatpush2.bf16.msra.mxu0 0
        %386 = vmatprep.subr.bf16.mxu0 0
        %387 = vmatpush2.bf16.msra.mxu0 0
        %388 = vmatprep.subr.bf16.mxu0 0
        %389 = vmatpush2.bf16.msra.mxu0 0
        %390 = vmatprep.subr.bf16.mxu0 0
        %391 = vmatpush2.bf16.msra.mxu0 0
        %392 = vmatprep.mubr.bf16.mxu0 0
        %393 = vmatmul.mubr.bf16.gmra.mxu0 %v228
        %v394 = vpop.f32.mrf.mxu0
        %v395 = vadd.f32 %v199, %v394
        %v396 = vpop.f32.mrf.mxu0
        %v397 = vpop.f32.mrf.mxu0
        %v398 = vadd.f32 %v204, %v397
        %v399 = vpop.f32.mrf.mxu0
        %400 = vmatprep.mubr.bf16.mxu0 0
        %401 = vmatmul.mubr.bf16.gmra.mxu0 %v231
        %v402 = vpop.f32.mrf.mxu0
        %v403 = vadd.f32 %v209, %v402
        %v404 = vpop.f32.mrf.mxu0
        %v405 = vpop.f32.mrf.mxu0
        %v406 = vadd.f32 %v214, %v405
        %v407 = vpop.f32.mrf.mxu0
        %408 = vmatprep.mubr.bf16.mxu0 0
        %409 = vmatmul.mubr.bf16.gmra.mxu0 %v234
        %v410 = vpop.f32.mrf.mxu0
        %v411 = vadd.f32 %v219, %v410
        %v412 = vpop.f32.mrf.mxu0
        %v413 = vpop.f32.mrf.mxu0
        %v414 = vadd.f32 %v224, %v413
        %v415 = vpop.f32.mrf.mxu0
        %416 = vdwg.mxu0
        %v418 = vsel %vm236, %v180, 0
        %420 = vmatprep.subr.bf16.mxu0 0
        %421 = vmatpush1.bf16.msra.mxu0 0
        %422 = vmatprep.subr.bf16.mxu0 0
        %423 = vmatpush1.bf16.msra.mxu0 0
        %424 = vmatprep.subr.bf16.mxu0 0
        %425 = vmatpush1.bf16.msra.mxu0 0
        %426 = vmatprep.subr.bf16.mxu0 0
        %427 = vmatpush1.bf16.msra.mxu0 0
        %428 = vmatprep.subr.bf16.mxu0 0
        %429 = vmatpush1.bf16.msra.mxu0 0
        %430 = vmatprep.subr.bf16.mxu0 0
        %431 = vmatpush1.bf16.msra.mxu0 0
        %432 = vmatprep.subr.bf16.mxu0 0
        %433 = vmatpush1.bf16.msra.mxu0 0
        %434 = vmatprep.subr.bf16.mxu0 0
        %435 = vmatpush1.bf16.msra.mxu0 %v418
        %436 = vmatprep.subr.bf16.mxu0 0
        %437 = vmatpush2.bf16.msra.mxu0 0
        %438 = vmatprep.subr.bf16.mxu0 0
        %439 = vmatpush2.bf16.msra.mxu0 0
        %440 = vmatprep.subr.bf16.mxu0 0
        %441 = vmatpush2.bf16.msra.mxu0 0
        %442 = vmatprep.subr.bf16.mxu0 0
        %443 = vmatpush2.bf16.msra.mxu0 0
        %444 = vmatprep.subr.bf16.mxu0 0
        %445 = vmatpush2.bf16.msra.mxu0 0
        %446 = vmatprep.subr.bf16.mxu0 0
        %447 = vmatpush2.bf16.msra.mxu0 0
        %448 = vmatprep.subr.bf16.mxu0 0
        %449 = vmatpush2.bf16.msra.mxu0 0
        %450 = vmatprep.subr.bf16.mxu0 0
        %451 = vmatpush2.bf16.msra.mxu0 0
        %452 = vmatprep.mubr.bf16.mxu0 0
        %453 = vmatmul.mubr.bf16.gmra.mxu0 %v228
        %v454 = vpop.f32.mrf.mxu0
        %v455 = vadd.f32 %v199, %v454
        %v456 = vpop.f32.mrf.mxu0
        %v457 = vpop.f32.mrf.mxu0
        %v458 = vadd.f32 %v204, %v457
        %v459 = vpop.f32.mrf.mxu0
        %460 = vmatprep.mubr.bf16.mxu0 0
        %461 = vmatmul.mubr.bf16.gmra.mxu0 %v231
        %v462 = vpop.f32.mrf.mxu0
        %v463 = vadd.f32 %v209, %v462
        %v464 = vpop.f32.mrf.mxu0
        %v465 = vpop.f32.mrf.mxu0
        %v466 = vadd.f32 %v214, %v465
        %v467 = vpop.f32.mrf.mxu0
        %468 = vmatprep.mubr.bf16.mxu0 0
        %469 = vmatmul.mubr.bf16.gmra.mxu0 %v234
        %v470 = vpop.f32.mrf.mxu0
        %v471 = vadd.f32 %v219, %v470
        %v472 = vpop.f32.mrf.mxu0
        %v473 = vpop.f32.mrf.mxu0
        %v474 = vadd.f32 %v224, %v473
        %v475 = vpop.f32.mrf.mxu0
        %476 = vdwg.mxu0
        %v477 = vpack.c.bf16 %v278, %v275
        %v478 = vpack.c.bf16 %v338, %v335
        %v479 = vpack.c.bf16 %v398, %v395
        %v480 = vpack.c.bf16 %v458, %v455
        %v481 = vpack.c.bf16 %v286, %v283
        %v482 = vpack.c.bf16 %v346, %v343
        %v483 = vpack.c.bf16 %v406, %v403
        %v484 = vpack.c.bf16 %v466, %v463
        %v485 = vpack.c.bf16 %v294, %v291
        %v486 = vpack.c.bf16 %v354, %v351
        %v487 = vpack.c.bf16 %v414, %v411
        %v488 = vpack.c.bf16 %v474, %v471
        %489 = vmatprep.subr.bf16.mxu0 0
        %490 = vmatpush1.bf16.xpose.msra.mxu0 0
        %491 = vmatprep.subr.bf16.mxu0 0
        %492 = vmatpush1.bf16.xpose.msra.mxu0 0
        %493 = vmatprep.subr.bf16.mxu0 0
        %494 = vmatpush1.bf16.xpose.msra.mxu0 0
        %495 = vmatprep.subr.bf16.mxu0 0
        %496 = vmatpush1.bf16.xpose.msra.mxu0 0
        %497 = vmatprep.subr.bf16.mxu0 0
        %498 = vmatpush1.bf16.xpose.msra.mxu0 0
        %499 = vmatprep.subr.bf16.mxu0 0
        %500 = vmatpush1.bf16.xpose.msra.mxu0 0
        %501 = vmatprep.subr.bf16.mxu0 0
        %502 = vmatpush1.bf16.xpose.msra.mxu0 0
        %503 = vmatprep.subr.bf16.mxu0 0
        %504 = vmatpush1.bf16.xpose.msra.mxu0 %v481
        %505 = vmatprep.subr.bf16.mxu0 0
        %506 = vmatpush2.bf16.xpose.msra.mxu0 0
        %507 = vmatprep.subr.bf16.mxu0 0
        %508 = vmatpush2.bf16.xpose.msra.mxu0 0
        %509 = vmatprep.subr.bf16.mxu0 0
        %510 = vmatpush2.bf16.xpose.msra.mxu0 0
        %511 = vmatprep.subr.bf16.mxu0 0
        %512 = vmatpush2.bf16.xpose.msra.mxu0 0
        %513 = vmatprep.subr.bf16.mxu0 0
        %514 = vmatpush2.bf16.xpose.msra.mxu0 0
        %515 = vmatprep.subr.bf16.mxu0 0
        %516 = vmatpush2.bf16.xpose.msra.mxu0 0
        %517 = vmatprep.subr.bf16.mxu0 0
        %518 = vmatpush2.bf16.xpose.msra.mxu0 0
        %519 = vmatprep.subr.bf16.mxu0 0
        %520 = vmatpush2.bf16.xpose.msra.mxu0 0
        %521 = vmatprep.mubr.bf16.mxu0 0
        %522 = vmatmul.mubr.bf16.gmra.mxu0 %v477
        %v523 = vpop.f32.mrf.mxu0
        %v524 = vadd.f32 0.0, %v523
        %v525 = vpop.f32.mrf.mxu0
        %v526 = vpop.f32.mrf.mxu0
        %v527 = vadd.f32 0.0, %v526
        %v528 = vpop.f32.mrf.mxu0
        %529 = vdwg.mxu0
        %530 = vmatprep.subr.bf16.mxu0 0
        %531 = vmatpush1.bf16.xpose.msra.mxu0 0
        %532 = vmatprep.subr.bf16.mxu0 0
        %533 = vmatpush1.bf16.xpose.msra.mxu0 0
        %534 = vmatprep.subr.bf16.mxu0 0
        %535 = vmatpush1.bf16.xpose.msra.mxu0 0
        %536 = vmatprep.subr.bf16.mxu0 0
        %537 = vmatpush1.bf16.xpose.msra.mxu0 0
        %538 = vmatprep.subr.bf16.mxu0 0
        %539 = vmatpush1.bf16.xpose.msra.mxu0 0
        %540 = vmatprep.subr.bf16.mxu0 0
        %541 = vmatpush1.bf16.xpose.msra.mxu0 0
        %542 = vmatprep.subr.bf16.mxu0 0
        %543 = vmatpush1.bf16.xpose.msra.mxu0 0
        %544 = vmatprep.subr.bf16.mxu0 0
        %545 = vmatpush1.bf16.xpose.msra.mxu0 %v482
        %546 = vmatprep.subr.bf16.mxu0 0
        %547 = vmatpush2.bf16.xpose.msra.mxu0 0
        %548 = vmatprep.subr.bf16.mxu0 0
        %549 = vmatpush2.bf16.xpose.msra.mxu0 0
        %550 = vmatprep.subr.bf16.mxu0 0
        %551 = vmatpush2.bf16.xpose.msra.mxu0 0
        %552 = vmatprep.subr.bf16.mxu0 0
        %553 = vmatpush2.bf16.xpose.msra.mxu0 0
        %554 = vmatprep.subr.bf16.mxu0 0
        %555 = vmatpush2.bf16.xpose.msra.mxu0 0
        %556 = vmatprep.subr.bf16.mxu0 0
        %557 = vmatpush2.bf16.xpose.msra.mxu0 0
        %558 = vmatprep.subr.bf16.mxu0 0
        %559 = vmatpush2.bf16.xpose.msra.mxu0 0
        %560 = vmatprep.subr.bf16.mxu0 0
        %561 = vmatpush2.bf16.xpose.msra.mxu0 0
        %562 = vmatprep.mubr.bf16.mxu0 0
        %563 = vmatmul.mubr.bf16.gmra.mxu0 %v478
        %v564 = vpop.f32.mrf.mxu0
        %v565 = vadd.f32 0.0, %v564
        %v566 = vpop.f32.mrf.mxu0
        %v567 = vpop.f32.mrf.mxu0
        %v568 = vadd.f32 0.0, %v567
        %v569 = vpop.f32.mrf.mxu0
        %570 = vdwg.mxu0
        %571 = vmatprep.subr.bf16.mxu0 0
        %572 = vmatpush1.bf16.xpose.msra.mxu0 0
        %573 = vmatprep.subr.bf16.mxu0 0
        %574 = vmatpush1.bf16.xpose.msra.mxu0 0
        %575 = vmatprep.subr.bf16.mxu0 0
        %576 = vmatpush1.bf16.xpose.msra.mxu0 0
        %577 = vmatprep.subr.bf16.mxu0 0
        %578 = vmatpush1.bf16.xpose.msra.mxu0 0
        %579 = vmatprep.subr.bf16.mxu0 0
        %580 = vmatpush1.bf16.xpose.msra.mxu0 0
        %581 = vmatprep.subr.bf16.mxu0 0
        %582 = vmatpush1.bf16.xpose.msra.mxu0 0
        %583 = vmatprep.subr.bf16.mxu0 0
        %584 = vmatpush1.bf16.xpose.msra.mxu0 0
        %585 = vmatprep.subr.bf16.mxu0 0
        %586 = vmatpush1.bf16.xpose.msra.mxu0 %v483
        %587 = vmatprep.subr.bf16.mxu0 0
        %588 = vmatpush2.bf16.xpose.msra.mxu0 0
        %589 = vmatprep.subr.bf16.mxu0 0
        %590 = vmatpush2.bf16.xpose.msra.mxu0 0
        %591 = vmatprep.subr.bf16.mxu0 0
        %592 = vmatpush2.bf16.xpose.msra.mxu0 0
        %593 = vmatprep.subr.bf16.mxu0 0
        %594 = vmatpush2.bf16.xpose.msra.mxu0 0
        %595 = vmatprep.subr.bf16.mxu0 0
        %596 = vmatpush2.bf16.xpose.msra.mxu0 0
        %597 = vmatprep.subr.bf16.mxu0 0
        %598 = vmatpush2.bf16.xpose.msra.mxu0 0
        %599 = vmatprep.subr.bf16.mxu0 0
        %600 = vmatpush2.bf16.xpose.msra.mxu0 0
        %601 = vmatprep.subr.bf16.mxu0 0
        %602 = vmatpush2.bf16.xpose.msra.mxu0 0
        %603 = vmatprep.mubr.bf16.mxu0 0
        %604 = vmatmul.mubr.bf16.gmra.mxu0 %v479
        %v605 = vpop.f32.mrf.mxu0
        %v606 = vadd.f32 0.0, %v605
        %v607 = vpop.f32.mrf.mxu0
        %v608 = vpop.f32.mrf.mxu0
        %v609 = vadd.f32 0.0, %v608
        %v610 = vpop.f32.mrf.mxu0
        %611 = vdwg.mxu0
        %612 = vmatprep.subr.bf16.mxu0 0
        %613 = vmatpush1.bf16.xpose.msra.mxu0 0
        %614 = vmatprep.subr.bf16.mxu0 0
        %615 = vmatpush1.bf16.xpose.msra.mxu0 0
        %616 = vmatprep.subr.bf16.mxu0 0
        %617 = vmatpush1.bf16.xpose.msra.mxu0 0
        %618 = vmatprep.subr.bf16.mxu0 0
        %619 = vmatpush1.bf16.xpose.msra.mxu0 0
        %620 = vmatprep.subr.bf16.mxu0 0
        %621 = vmatpush1.bf16.xpose.msra.mxu0 0
        %622 = vmatprep.subr.bf16.mxu0 0
        %623 = vmatpush1.bf16.xpose.msra.mxu0 0
        %624 = vmatprep.subr.bf16.mxu0 0
        %625 = vmatpush1.bf16.xpose.msra.mxu0 0
        %626 = vmatprep.subr.bf16.mxu0 0
        %627 = vmatpush1.bf16.xpose.msra.mxu0 %v484
        %628 = vmatprep.subr.bf16.mxu0 0
        %629 = vmatpush2.bf16.xpose.msra.mxu0 0
        %630 = vmatprep.subr.bf16.mxu0 0
        %631 = vmatpush2.bf16.xpose.msra.mxu0 0
        %632 = vmatprep.subr.bf16.mxu0 0
        %633 = vmatpush2.bf16.xpose.msra.mxu0 0
        %634 = vmatprep.subr.bf16.mxu0 0
        %635 = vmatpush2.bf16.xpose.msra.mxu0 0
        %636 = vmatprep.subr.bf16.mxu0 0
        %637 = vmatpush2.bf16.xpose.msra.mxu0 0
        %638 = vmatprep.subr.bf16.mxu0 0
        %639 = vmatpush2.bf16.xpose.msra.mxu0 0
        %640 = vmatprep.subr.bf16.mxu0 0
        %641 = vmatpush2.bf16.xpose.msra.mxu0 0
        %642 = vmatprep.subr.bf16.mxu0 0
        %643 = vmatpush2.bf16.xpose.msra.mxu0 0
        %644 = vmatprep.mubr.bf16.mxu0 0
        %645 = vmatmul.mubr.bf16.gmra.mxu0 %v480
        %v646 = vpop.f32.mrf.mxu0
        %v647 = vadd.f32 0.0, %v646
        %v648 = vpop.f32.mrf.mxu0
        %v649 = vpop.f32.mrf.mxu0
        %v650 = vadd.f32 0.0, %v649
        %v651 = vpop.f32.mrf.mxu0
        %652 = vdwg.mxu0
        %vm653 = vcmask 130048
        %v654 = vsel %vm653, %v524, -inf
        %655 = vmax.xlane.f32.xlu0 %v654
        %v656 = vpop.xlane.xlu0 %655
        %v657 = vsel %vm653, %v527, -inf
        %658 = vmax.xlane.f32.xlu0 %v657
        %v659 = vpop.xlane.xlu0 %658
        %v660 = vsel %vm653, %v565, -inf
        %661 = vmax.xlane.f32.xlu0 %v660
        %v662 = vpop.xlane.xlu0 %661
        %v663 = vsel %vm653, %v568, -inf
        %664 = vmax.xlane.f32.xlu0 %v663
        %v665 = vpop.xlane.xlu0 %664
        %v666 = vsel %vm653, %v606, -inf
        %667 = vmax.xlane.f32.xlu0 %v666
        %v668 = vpop.xlane.xlu0 %667
        %v669 = vsel %vm653, %v609, -inf
        %670 = vmax.xlane.f32.xlu0 %v669
        %v671 = vpop.xlane.xlu0 %670
        %v672 = vsel %vm653, %v647, -inf
        %673 = vmax.xlane.f32.xlu0 %v672
        %v674 = vpop.xlane.xlu0 %673
        %v675 = vsel %vm653, %v650, -inf
        %676 = vmax.xlane.f32.xlu0 %v675
        %v677 = vpop.xlane.xlu0 %676
        %v678 = vsub.f32 %v524, %v656
        %v679 = vsub.f32 %v527, %v659
        %v680 = vsub.f32 %v565, %v662
        %v681 = vsub.f32 %v568, %v665
        %v682 = vsub.f32 %v606, %v668
        %v683 = vsub.f32 %v609, %v671
        %v684 = vsub.f32 %v647, %v674
        %v685 = vsub.f32 %v650, %v677
        %v686 = vmul.f32 %v678, 1.442695
        %v687 = vpow.pop %v686
        %v688 = vmul.f32 %v679, 1.442695
        %v689 = vpow.pop %v688
        %v690 = vmul.f32 %v680, 1.442695
        %v691 = vpow.pop %v690
        %v692 = vmul.f32 %v681, 1.442695
        %v693 = vpow.pop %v692
        %v694 = vmul.f32 %v682, 1.442695
        %v695 = vpow.pop %v694
        %v696 = vmul.f32 %v683, 1.442695
        %v697 = vpow.pop %v696
        %v698 = vmul.f32 %v684, 1.442695
        %v699 = vpow.pop %v698
        %v700 = vmul.f32 %v685, 1.442695
        %v701 = vpow.pop %v700
        %v702 = vsel %vm653, %v687, 0.0
        %703 = vadd.xlane.f32.xlu0 %v702
        %v704 = vpop.xlane.xlu0 %703
        %v705 = vsel %vm653, %v689, 0.0
        %706 = vadd.xlane.f32.xlu0 %v705
        %v707 = vpop.xlane.xlu0 %706
        %v708 = vsel %vm653, %v691, 0.0
        %709 = vadd.xlane.f32.xlu0 %v708
        %v710 = vpop.xlane.xlu0 %709
        %v711 = vsel %vm653, %v693, 0.0
        %712 = vadd.xlane.f32.xlu0 %v711
        %v713 = vpop.xlane.xlu0 %712
        %v714 = vsel %vm653, %v695, 0.0
        %715 = vadd.xlane.f32.xlu0 %v714
        %v716 = vpop.xlane.xlu0 %715
        %v717 = vsel %vm653, %v697, 0.0
        %718 = vadd.xlane.f32.xlu0 %v717
        %v719 = vpop.xlane.xlu0 %718
        %v720 = vsel %vm653, %v699, 0.0
        %721 = vadd.xlane.f32.xlu0 %v720
        %v722 = vpop.xlane.xlu0 %721
        %v723 = vsel %vm653, %v701, 0.0
        %724 = vadd.xlane.f32.xlu0 %v723
        %v725 = vpop.xlane.xlu0 %724
        %v726 = vrcp.pop %v704
        %v727 = vrcp.pop %v707
        %v728 = vrcp.pop %v710
        %v729 = vrcp.pop %v713
        %v730 = vrcp.pop %v716
        %v731 = vrcp.pop %v719
        %v732 = vrcp.pop %v722
        %v733 = vrcp.pop %v725
        %v734 = vmul.f32 %v687, %v726
        %v735 = vmul.f32 %v689, %v727
        %v736 = vmul.f32 %v691, %v728
        %v737 = vmul.f32 %v693, %v729
        %v738 = vmul.f32 %v695, %v730
        %v739 = vmul.f32 %v697, %v731
        %v740 = vmul.f32 %v699, %v732
        %v741 = vmul.f32 %v701, %v733
        %v742 = vpack.c.bf16 %v735, %v734
        %v743 = vpack.c.bf16 %v737, %v736
        %v744 = vpack.c.bf16 %v739, %v738
        %v745 = vpack.c.bf16 %v741, %v740
        %v747 = vsel %vm653, %v742, 0
        %749 = vmatprep.subr.bf16.mxu0 0
        %750 = vmatpush1.bf16.msra.mxu0 0
        %751 = vmatprep.subr.bf16.mxu0 0
        %752 = vmatpush1.bf16.msra.mxu0 0
        %753 = vmatprep.subr.bf16.mxu0 0
        %754 = vmatpush1.bf16.msra.mxu0 0
        %755 = vmatprep.subr.bf16.mxu0 0
        %756 = vmatpush1.bf16.msra.mxu0 0
        %757 = vmatprep.subr.bf16.mxu0 0
        %758 = vmatpush1.bf16.msra.mxu0 0
        %759 = vmatprep.subr.bf16.mxu0 0
        %760 = vmatpush1.bf16.msra.mxu0 0
        %761 = vmatprep.subr.bf16.mxu0 0
        %762 = vmatpush1.bf16.msra.mxu0 0
        %763 = vmatprep.subr.bf16.mxu0 0
        %764 = vmatpush1.bf16.msra.mxu0 %v485
        %765 = vmatprep.subr.bf16.mxu0 0
        %766 = vmatpush2.bf16.msra.mxu0 0
        %767 = vmatprep.subr.bf16.mxu0 0
        %768 = vmatpush2.bf16.msra.mxu0 0
        %769 = vmatprep.subr.bf16.mxu0 0
        %770 = vmatpush2.bf16.msra.mxu0 0
        %771 = vmatprep.subr.bf16.mxu0 0
        %772 = vmatpush2.bf16.msra.mxu0 0
        %773 = vmatprep.subr.bf16.mxu0 0
        %774 = vmatpush2.bf16.msra.mxu0 0
        %775 = vmatprep.subr.bf16.mxu0 0
        %776 = vmatpush2.bf16.msra.mxu0 0
        %777 = vmatprep.subr.bf16.mxu0 0
        %778 = vmatpush2.bf16.msra.mxu0 0
        %779 = vmatprep.subr.bf16.mxu0 0
        %780 = vmatpush2.bf16.msra.mxu0 0
        %781 = vmatprep.mubr.bf16.mxu0 0
        %782 = vmatmul.mubr.bf16.gmra.mxu0 %v747
        %v783 = vpop.f32.mrf.mxu0
        %v784 = vadd.f32 0.0, %v783
        %v785 = vpop.f32.mrf.mxu0
        %v786 = vpop.f32.mrf.mxu0
        %v787 = vadd.f32 0.0, %v786
        %v788 = vpop.f32.mrf.mxu0
        %789 = vdwg.mxu0
        %v791 = vsel %vm653, %v743, 0
        %793 = vmatprep.subr.bf16.mxu0 0
        %794 = vmatpush1.bf16.msra.mxu0 0
        %795 = vmatprep.subr.bf16.mxu0 0
        %796 = vmatpush1.bf16.msra.mxu0 0
        %797 = vmatprep.subr.bf16.mxu0 0
        %798 = vmatpush1.bf16.msra.mxu0 0
        %799 = vmatprep.subr.bf16.mxu0 0
        %800 = vmatpush1.bf16.msra.mxu0 0
        %801 = vmatprep.subr.bf16.mxu0 0
        %802 = vmatpush1.bf16.msra.mxu0 0
        %803 = vmatprep.subr.bf16.mxu0 0
        %804 = vmatpush1.bf16.msra.mxu0 0
        %805 = vmatprep.subr.bf16.mxu0 0
        %806 = vmatpush1.bf16.msra.mxu0 0
        %807 = vmatprep.subr.bf16.mxu0 0
        %808 = vmatpush1.bf16.msra.mxu0 %v486
        %809 = vmatprep.subr.bf16.mxu0 0
        %810 = vmatpush2.bf16.msra.mxu0 0
        %811 = vmatprep.subr.bf16.mxu0 0
        %812 = vmatpush2.bf16.msra.mxu0 0
        %813 = vmatprep.subr.bf16.mxu0 0
        %814 = vmatpush2.bf16.msra.mxu0 0
        %815 = vmatprep.subr.bf16.mxu0 0
        %816 = vmatpush2.bf16.msra.mxu0 0
        %817 = vmatprep.subr.bf16.mxu0 0
        %818 = vmatpush2.bf16.msra.mxu0 0
        %819 = vmatprep.subr.bf16.mxu0 0
        %820 = vmatpush2.bf16.msra.mxu0 0
        %821 = vmatprep.subr.bf16.mxu0 0
        %822 = vmatpush2.bf16.msra.mxu0 0
        %823 = vmatprep.subr.bf16.mxu0 0
        %824 = vmatpush2.bf16.msra.mxu0 0
        %825 = vmatprep.mubr.bf16.mxu0 0
        %826 = vmatmul.mubr.bf16.gmra.mxu0 %v791
        %v827 = vpop.f32.mrf.mxu0
        %v828 = vadd.f32 0.0, %v827
        %v829 = vpop.f32.mrf.mxu0
        %v830 = vpop.f32.mrf.mxu0
        %v831 = vadd.f32 0.0, %v830
        %v832 = vpop.f32.mrf.mxu0
        %833 = vdwg.mxu0
        %v835 = vsel %vm653, %v744, 0
        %837 = vmatprep.subr.bf16.mxu0 0
        %838 = vmatpush1.bf16.msra.mxu0 0
        %839 = vmatprep.subr.bf16.mxu0 0
        %840 = vmatpush1.bf16.msra.mxu0 0
        %841 = vmatprep.subr.bf16.mxu0 0
        %842 = vmatpush1.bf16.msra.mxu0 0
        %843 = vmatprep.subr.bf16.mxu0 0
        %844 = vmatpush1.bf16.msra.mxu0 0
        %845 = vmatprep.subr.bf16.mxu0 0
        %846 = vmatpush1.bf16.msra.mxu0 0
        %847 = vmatprep.subr.bf16.mxu0 0
        %848 = vmatpush1.bf16.msra.mxu0 0
        %849 = vmatprep.subr.bf16.mxu0 0
        %850 = vmatpush1.bf16.msra.mxu0 0
        %851 = vmatprep.subr.bf16.mxu0 0
        %852 = vmatpush1.bf16.msra.mxu0 %v487
        %853 = vmatprep.subr.bf16.mxu0 0
        %854 = vmatpush2.bf16.msra.mxu0 0
        %855 = vmatprep.subr.bf16.mxu0 0
        %856 = vmatpush2.bf16.msra.mxu0 0
        %857 = vmatprep.subr.bf16.mxu0 0
        %858 = vmatpush2.bf16.msra.mxu0 0
        %859 = vmatprep.subr.bf16.mxu0 0
        %860 = vmatpush2.bf16.msra.mxu0 0
        %861 = vmatprep.subr.bf16.mxu0 0
        %862 = vmatpush2.bf16.msra.mxu0 0
        %863 = vmatprep.subr.bf16.mxu0 0
        %864 = vmatpush2.bf16.msra.mxu0 0
        %865 = vmatprep.subr.bf16.mxu0 0
        %866 = vmatpush2.bf16.msra.mxu0 0
        %867 = vmatprep.subr.bf16.mxu0 0
        %868 = vmatpush2.bf16.msra.mxu0 0
        %869 = vmatprep.mubr.bf16.mxu0 0
        %870 = vmatmul.mubr.bf16.gmra.mxu0 %v835
        %v871 = vpop.f32.mrf.mxu0
        %v872 = vadd.f32 0.0, %v871
        %v873 = vpop.f32.mrf.mxu0
        %v874 = vpop.f32.mrf.mxu0
        %v875 = vadd.f32 0.0, %v874
        %v876 = vpop.f32.mrf.mxu0
        %877 = vdwg.mxu0
        %v879 = vsel %vm653, %v745, 0
        %881 = vmatprep.subr.bf16.mxu0 0
        %882 = vmatpush1.bf16.msra.mxu0 0
        %883 = vmatprep.subr.bf16.mxu0 0
        %884 = vmatpush1.bf16.msra.mxu0 0
        %885 = vmatprep.subr.bf16.mxu0 0
        %886 = vmatpush1.bf16.msra.mxu0 0
        %887 = vmatprep.subr.bf16.mxu0 0
        %888 = vmatpush1.bf16.msra.mxu0 0
        %889 = vmatprep.subr.bf16.mxu0 0
        %890 = vmatpush1.bf16.msra.mxu0 0
        %891 = vmatprep.subr.bf16.mxu0 0
        %892 = vmatpush1.bf16.msra.mxu0 0
        %893 = vmatprep.subr.bf16.mxu0 0
        %894 = vmatpush1.bf16.msra.mxu0 0
        %895 = vmatprep.subr.bf16.mxu0 0
        %896 = vmatpush1.bf16.msra.mxu0 %v488
        %897 = vmatprep.subr.bf16.mxu0 0
        %898 = vmatpush2.bf16.msra.mxu0 0
        %899 = vmatprep.subr.bf16.mxu0 0
        %900 = vmatpush2.bf16.msra.mxu0 0
        %901 = vmatprep.subr.bf16.mxu0 0
        %902 = vmatpush2.bf16.msra.mxu0 0
        %903 = vmatprep.subr.bf16.mxu0 0
        %904 = vmatpush2.bf16.msra.mxu0 0
        %905 = vmatprep.subr.bf16.mxu0 0
        %906 = vmatpush2.bf16.msra.mxu0 0
        %907 = vmatprep.subr.bf16.mxu0 0
        %908 = vmatpush2.bf16.msra.mxu0 0
        %909 = vmatprep.subr.bf16.mxu0 0
        %910 = vmatpush2.bf16.msra.mxu0 0
        %911 = vmatprep.subr.bf16.mxu0 0
        %912 = vmatpush2.bf16.msra.mxu0 0
        %913 = vmatprep.mubr.bf16.mxu0 0
        %914 = vmatmul.mubr.bf16.gmra.mxu0 %v879
        %v915 = vpop.f32.mrf.mxu0
        %v916 = vadd.f32 0.0, %v915
        %v917 = vpop.f32.mrf.mxu0
        %v918 = vpop.f32.mrf.mxu0
        %v919 = vadd.f32 0.0, %v918
        %v920 = vpop.f32.mrf.mxu0
        %921 = vdwg.mxu0
        %922 = vst [vmem:[%s164] sm:$0xff] %v784
        %923 = vst [vmem:[%s164 + $0x8] sm:$0xff] %v787
        %924 = vst [vmem:[%s164 + $0x10] sm:$0xff] %v828
        %925 = vst [vmem:[%s164 + $0x18] sm:$0xff] %v831
        %926 = vst [vmem:[%s164 + $0x20] sm:$0xff] %v872
        %927 = vst [vmem:[%s164 + $0x28] sm:$0xff] %v875
        %928 = vst [vmem:[%s164 + $0x30] sm:$0xff] %v916
        %929 = vst [vmem:[%s164 + $0x38] sm:$0xff] %v919
        %s930 = sand.u32 %s93, 1
        %s931 = scalar_lea.sflag [#allocation3], %s930
        %s932 = sand.u32 %s93, 1
        %s933 = smul.addr %s932, 64
        %s934 = scalar_lea.vmem [#allocation2], %s933
        // Predicated region
        $region33: #{tpu_custom_call.1} parent=31 // pred_check
          %p935 = pneg %p103
        $region34: #{tpu_custom_call.1} parent=31 // pred_check_branch
          %937 = sbr.rel (%p935) target = $region36
        $region35: #{tpu_custom_call.1} parent=31 // pred_region
          %s938 = smul.u32 4, %s17
          %s940 = ssub.s32 1024, 1024
          %941 = vsyncadd %s931, %s940
          %s942 = smul.addr %s938, 2
          %s943 = smul.addr %s942, 128
          %s944 = scalar_lea.hbm %s3, %s943
          %s945 = sshll.u32 %s934, 4
          %s946 = int_to_ptr.vmem [resolvable:$true] %s945
          %951 = dma.vmem_to_hbm [thread:$0]  %s946, 1024, %s944, %s931, 128, 128, 8
        $region36: #{tpu_custom_call.1} parent=31 // pred_fallthru
          _
      $region32: #{tpu_custom_call.1} parent=5 // pred_fallthru
        _
      %p952 = scmp.le.s32.totalorder 2, %s12
      // Predicated region
      $region37: #{tpu_custom_call.1} parent=5 // pred_check
        %p953 = pneg %p952
      $region38: #{tpu_custom_call.1} parent=5 // pred_check_branch
        %955 = sbr.rel (%p953) target = $region40
      $region39: #{tpu_custom_call.1} parent=5 // pred_region
        %s956 = ssub.s32 %s12, 2
        // Predicated region
        $region41: #{tpu_custom_call.1} parent=39 // pred_check
          %p957 = pneg %p109
        $region42: #{tpu_custom_call.1} parent=39 // pred_check_branch
          %959 = sbr.rel (%p957) target = $region44
        $region43: #{tpu_custom_call.1} parent=39 // pred_region
          %s960 = sand.u32 %s94, 1
          %s961 = scalar_lea.sflag [#allocation3], %s960
          %s962 = sand.u32 %s94, 1
          %s963 = smul.addr %s962, 64
          %s964 = scalar_lea.vmem [#allocation2], %s963
          %965 = dma.done %s961, 1024
        $region44: #{tpu_custom_call.1} parent=39 // pred_fallthru
          _
      $region40: #{tpu_custom_call.1} parent=5 // pred_fallthru
        _
    $region6: #{tpu_custom_call.1} parent=1 // loop_footer
      %s16 = sadd.s32 1, %s12
    $region7: #{tpu_custom_call.1} parent=1 // loop_footer_branch
      %11 = sbr.rel target = $region3
    $region8: #{tpu_custom_call.1} parent=1 // loop_exit
      _
    %966 = vsyncpa [#allocation3], 1
    %s967 = scalar_lea.sflag [#allocation3], 1
    %968 = vsyncpa %s967, 1

</llo_original>
